<compile_context>
chip_gen: v6e
topology: v6e:2x2x1
jax: 0.10.0
libtpu: 0.0.40
codegen_flags: <defaults>
</compile_context>

<pallas_src>
import jax
import jax.numpy as jnp
from jax.experimental import pallas as pl
from jax.experimental.pallas import tpu as pltpu


# ---------------------------------------------------------------------------
# Pallas HBM -> HBM copy (optionally chunked for higher DMA concurrency).
# ---------------------------------------------------------------------------

def _make_hbm_copy_kernel(num_chunks, chunk_rows):
    """Build a kernel that copies x_ref -> o_ref via `num_chunks` DMAs.

    Both refs live in HBM (memory_space=pl.ANY); no VMEM staging, no grid.
    num_chunks/chunk_rows are static Python ints, so the chunk loop unrolls
    at trace time into `num_chunks` start() calls followed by the waits.
    """

    def kernel(x_hbm_ref, o_hbm_ref, sems):
        if num_chunks == 1:
            cp = pltpu.make_async_copy(x_hbm_ref, o_hbm_ref, sems.at[0])
            cp.start()
            cp.wait()
        else:
            copies = []
            for i in range(num_chunks):
                sl = pl.ds(i * chunk_rows, chunk_rows)
                cp = pltpu.make_async_copy(
                    x_hbm_ref.at[sl], o_hbm_ref.at[sl], sems.at[i]
                )
                cp.start()
                copies.append(cp)
            for cp in copies:
                cp.wait()

    return kernel


def _hbm_to_hbm_copy(x, num_chunks=1):
    """Materialize a copy of `x` via direct HBM->HBM DMA(s), no VMEM staging."""
    rows = x.shape[0] if x.ndim >= 1 else 1
    if num_chunks > 1 and (x.ndim == 0 or rows % num_chunks != 0):
        num_chunks = 1  # fall back to one whole-array DMA
    chunk_rows = rows // num_chunks if num_chunks > 1 else rows

    nbytes = x.size * x.dtype.itemsize
    kernel = _make_hbm_copy_kernel(num_chunks, chunk_rows)

    return pl.pallas_call(
        kernel,
        out_shape=jax.ShapeDtypeStruct(x.shape, x.dtype),
        in_specs=[pl.BlockSpec(memory_space=pl.ANY)],
        out_specs=pl.BlockSpec(memory_space=pl.ANY),
        # Shaped (called) constructor — version-stable form.
        scratch_shapes=[pltpu.SemaphoreType.DMA((num_chunks,))],
        # Byte-accurate hint so XLA can overlap the copy with surrounding HLO.
        cost_estimate=pl.CostEstimate(
            flops=0, transcendentals=0, bytes_accessed=2 * nbytes
        ),
    )(x)


# ---------------------------------------------------------------------------
# TxtEncoder.forward equivalent.
# ---------------------------------------------------------------------------

_PALLAS_COPY_MIN_BYTES = 1 << 20   # below this, a Pallas launch isn't worth it
_CHUNKED_COPY_MIN_BYTES = 32 << 20  # above this, use multiple outstanding DMAs


def _pick_num_chunks(x):
    """Choose DMA chunk count: >1 only for very large arrays (v7x BW target)."""
    nbytes = x.size * x.dtype.itemsize
    if x.ndim == 0 or nbytes < _CHUNKED_COPY_MIN_BYTES:
        return 1
    for k in (8, 4, 2):
        if x.shape[0] % k == 0:
            return k
    return 1


def txt_encoder_forward(caption_feat_dict, materialize_copy=False):
    """Pallas/JAX equivalent of TxtEncoder.forward.

    caption_feat_dict: dict with key 'caption' -> jnp.ndarray (e.g. [B, S, H])
    materialize_copy:  if True, force `text_features` into a distinct buffer
                       (tiny arrays: XLA copy; large arrays: HBM->HBM DMA).
                       Default False: zero-copy alias — optimal, since the
                       PyTorch module also just re-exposes the same tensor.
    returns: dict with key 'text_features'.
    """
    caption = caption_feat_dict["caption"]

    if materialize_copy:
        nbytes = caption.size * caption.dtype.itemsize
        if nbytes < _PALLAS_COPY_MIN_BYTES:
            # Tiny input: a Pallas launch (µs-scale) would dominate; let XLA
            # do (and possibly elide/fuse) the copy.
            text_features = jnp.copy(caption)
        else:
            text_features = _hbm_to_hbm_copy(
                caption, num_chunks=_pick_num_chunks(caption)
            )
            # TODO(synk): on v7x, optionally issue the chunked DMAs from both
            # TensorCores (core_map / parallel leading grid axis) if this path
            # ever becomes hot enough to need full-chip HBM bandwidth.
    else:
        # Identity pass-through: no copy, no kernel — the optimal "kernel".
        # NOTE: `text_features` aliases `caption` (JAX arrays are immutable,
        # so this is safe); request materialize_copy=True if a distinct /
        # donatable buffer is required.
        text_features = caption

    # TxtEncoder.__init__ defines no parameters; forward has no learned
    # compute, so there is nothing else to translate.
    # (The unused `task3` flag from the PyTorch signature is dropped.)
    output = {}
    output["text_features"] = text_features
    return output


if __name__ == "__main__":
    key = jax.random.PRNGKey(0)
    B, S, H = 2, 8, 32  # batch, seq, hidden
    caption = jax.random.normal(key, (B, S, H), dtype=jnp.float32)

    # 1) Default hot path: zero-copy pass-through.
    out_fast = txt_encoder_forward({"caption": caption})
    feats_fast = jax.block_until_ready(out_fast["text_features"])
    assert feats_fast.shape == (B, S, H)
    assert feats_fast.dtype == caption.dtype
    assert bool(jnp.all(feats_fast == caption))

    # 2) materialize_copy on a tiny input: falls back to the XLA copy.
    out_copy = txt_encoder_forward({"caption": caption}, materialize_copy=True)
    feats_copy = jax.block_until_ready(out_copy["text_features"])
    assert feats_copy.shape == (B, S, H)
    assert feats_copy.dtype == caption.dtype
    assert bool(jnp.all(feats_copy == caption))

    # 3) Exercise the Pallas HBM->HBM DMA path directly (single DMA and the
    #    chunked variant) on the same small input to validate the kernel.
    feats_dma1 = jax.block_until_ready(_hbm_to_hbm_copy(caption, num_chunks=1))
    assert feats_dma1.shape == (B, S, H)
    assert feats_dma1.dtype == caption.dtype
    assert bool(jnp.all(feats_dma1 == caption))

    feats_dma2 = jax.block_until_ready(_hbm_to_hbm_copy(caption, num_chunks=2))
    assert feats_dma2.shape == (B, S, H)
    assert feats_dma2.dtype == caption.dtype
    assert bool(jnp.all(feats_dma2 == caption))

    print("KERNEL_OK")
</pallas_src>

<mosaic_0001>
module attributes {stable_mosaic.version = 11 : i64} {
  func.func @kernel(%arg0: memref<2x8x32xf32, #tpu.memory_space<any>>, %arg1: memref<2x8x32xf32, #tpu.memory_space<any>>, %arg2: memref<1x!tpu.dma_semaphore, #tpu.memory_space<semaphore_mem>>) attributes {dimension_semantics = [], scalar_prefetch = 0 : i64, scratch_operands = 1 : i64, tpu.core_type = #tpu.core_type<tc>} {
    %c0_i32 = arith.constant 0 : i32
    %0 = tpu.memref_slice %arg2[%c0_i32] : memref<1x!tpu.dma_semaphore, #tpu.memory_space<semaphore_mem>> -> memref<1x!tpu.dma_semaphore, #tpu.memory_space<semaphore_mem>>
    %1 = tpu.memref_squeeze %0 : memref<1x!tpu.dma_semaphore, #tpu.memory_space<semaphore_mem>> -> memref<!tpu.dma_semaphore, #tpu.memory_space<semaphore_mem>>
    tpu.enqueue_dma source(%arg0 : memref<2x8x32xf32, #tpu.memory_space<any>>) target(%arg1 : memref<2x8x32xf32, #tpu.memory_space<any>>) target_semaphore(%1 : memref<!tpu.dma_semaphore, #tpu.memory_space<semaphore_mem>>)
    %c0_i32_0 = arith.constant 0 : i32
    %2 = tpu.memref_slice %arg2[%c0_i32_0] : memref<1x!tpu.dma_semaphore, #tpu.memory_space<semaphore_mem>> -> memref<1x!tpu.dma_semaphore, #tpu.memory_space<semaphore_mem>>
    %3 = tpu.memref_squeeze %2 : memref<1x!tpu.dma_semaphore, #tpu.memory_space<semaphore_mem>> -> memref<!tpu.dma_semaphore, #tpu.memory_space<semaphore_mem>>
    tpu.wait_dma2 semaphore(%3 : memref<!tpu.dma_semaphore, #tpu.memory_space<semaphore_mem>>) src(%arg0 : memref<2x8x32xf32, #tpu.memory_space<any>>) dst(%arg1 : memref<2x8x32xf32, #tpu.memory_space<any>>)
    return
  }
}

</mosaic_0001>

<llo_original>
// kernel: tpu_custom_call.1
$region0: #{tpu_custom_call.1}
  #allocation0 [shape = 'u32[]', space=smem, size = 0x4, offset = 0x4, fixed_abs, tag = 'smem constant byte address 0x4 - core index']
  #allocation1 [shape = 'u32[144,128]{1,0:T(1,128)}', space=vmem, size = 0x12000, scoped, tag = 'internal scratch']
  #allocation2 [shape = 's32[1]{0}', space=sflag, size = 0x4, scoped, tag = 'scratch operand']
  #allocation3 [shape = 's32[]', space=sflag, size = 0x4, offset = 0, fixed_abs, tag = 'sflag constant byte address 0x0 - dummy sync flag']
  #allocation4 [shape = 'u32[0]{0}', space=smem, size = 0, offset = 0, fixed_abs, tag = 'smem constant byte address 0x0 - null']
  %s0 = inlined_call_operand.hbm [shape: f32[2,8,32], index: 0, kind: input, shape index: {}]
  %s1 = inlined_call_operand.hbm [shape: f32[2,8,32], index: 1, kind: output, shape index: {}]
  %s2 = sld [smem:[#allocation0]]
  $region2: #{tpu_custom_call.1} parent=0
    _
  %s4 = ssub.s32 1, %s2
  %s5 = scalar_select 0, %s4, %s2
  %s7 = sshll.u32 1, 14
  %s8 = sxor.u32 4294967295, %s7
  %12 = dma.general %s0, 256, %s1, [#allocation2], 131072, [#allocation4], 0, 0
  %s13 = smul.u32 2, 8
  %s14 = smul.u32 %s13, 1
  %s15 = sshll.u32 %s14, 4
  %16 = dma.done [#allocation2], %s15
  %17 = vsyncmov [#allocation2]
  %s18 = vpop.sfrf %17
  %p19 = scmp.eq.s32.totalorder %s18, 0
  %p20 = pneg %p19
  %22 = shalt.err (%p20)

</llo_original>
